<compile_context>
chip_gen: v5e
topology: v5e:2x2
jax: 0.10.0
libtpu: 0.0.40
codegen_flags: <defaults>
</compile_context>

<pallas_src>
import numpy as np
import jax
import jax.numpy as jnp
from jax.experimental import pallas as pl
from jax.experimental.pallas import tpu as pltpu

NPAD = 128          # lane-padded output width (true output width is 10)
NUM_OUT = 10


def poly_regression_kernel(x_ref, w_ref, b_ref, o_ref):
    # x_ref: (TB, F) f32   w_ref: (F, (F+1)*NPAD) f32   b_ref: (1, NPAD) f32
    # o_ref: (TB, NPAD) f32
    x = x_ref[...]                                  # (TB, F)
    F = x.shape[1]
    npad = b_ref.shape[1]

    # Single MXU matmul: m[b, i*npad + n] = sum_j x[b,j] * Q[i,j,n]   (i < F)
    #                    m[b, F*npad + n] = sum_j x[b,j] * W_lin[j,n]
    m = jnp.dot(x, w_ref[...], preferred_element_type=jnp.float32)   # (TB, (F+1)*npad)

    # bias + linear term
    out = b_ref[...] + m[:, F * npad:(F + 1) * npad]

    # quadratic term: sum_i x_i * (x @ Q[i])  -- static, 128-aligned lane slices (VPU only)
    for i in range(F):
        out = out + x[:, i:i + 1] * m[:, i * npad:(i + 1) * npad]

    o_ref[...] = out


def prepare_weights(W_full, F, npad=NPAD):
    """Offline, one-time packing of the Linear weight (10, P) into the fused layout.

    P = 1 + F + F*(F+1)//2 with sklearn PolynomialFeatures(2) column order
    [1, x_0..x_{F-1}, x_i*x_j (i<=j, row-major upper triangle)].
    Returns (w_packed (F, (F+1)*npad) f32, b_packed (1, npad) f32) as device arrays.
    """
    W = np.asarray(W_full, dtype=np.float32)              # (10, P)
    N = W.shape[0]
    P = 1 + F + F * (F + 1) // 2
    assert W.shape == (N, P), (W.shape, (N, P))
    assert N <= npad

    # bias feature weight
    b_packed = np.zeros((1, npad), np.float32)
    b_packed[0, :N] = W[:, 0]

    # linear weights
    W_lin = W[:, 1:1 + F].T                                # (F, N)

    # quadratic weights -> upper triangle of (F, F, N) in sklearn column order
    iu, ju = np.triu_indices(F)
    Q = np.zeros((F, F, N), np.float32)
    Q[iu, ju, :] = W[:, 1 + F:].T                          # (F*(F+1)/2, N)

    # fused, lane-dense packing: slot i (< F) holds Q[i], slot F holds W_lin
    w_packed = np.zeros((F, (F + 1) * npad), np.float32)
    for i in range(F):
        w_packed[:, i * npad:i * npad + N] = Q[i]          # rows j, cols n
    w_packed[:, F * npad:F * npad + N] = W_lin

    return jnp.asarray(w_packed), jnp.asarray(b_packed)


def polynomial_regression_forward(x_nchw, w_packed, b_packed, *, block_b=512):
    """x_nchw: (B, C, H, W) f32; packed weights from prepare_weights. -> (B, 10) f32."""
    B = x_nchw.shape[0]
    x_flat = x_nchw.reshape(B, -1).astype(jnp.float32)     # == torch x.view(B, -1)
    F = x_flat.shape[1]
    npad = b_packed.shape[1]
    assert w_packed.shape == (F, (F + 1) * npad)

    tb = min(block_b, B)
    grid = (pl.cdiv(B, tb),)

    # explicit VMEM budget: x (2x buffered) + resident weights + m intermediate + out
    vmem_bytes = (2 * tb * F * 4
                  + w_packed.size * 4 + b_packed.size * 4
                  + 2 * tb * (F + 1) * npad * 4
                  + 2 * tb * npad * 4
                  + (2 << 20))
    vmem_bytes = int(max(vmem_bytes, 16 * 1024 * 1024))

    out = pl.pallas_call(
        poly_regression_kernel,
        out_shape=jax.ShapeDtypeStruct((B, npad), jnp.float32),
        grid_spec=pltpu.PrefetchScalarGridSpec(
            num_scalar_prefetch=0,
            grid=grid,
            in_specs=[
                pl.BlockSpec((tb, F), lambda i: (i, 0)),                 # x batch tile
                pl.BlockSpec((F, (F + 1) * npad), lambda i: (0, 0)),     # resident weights
                pl.BlockSpec((1, npad), lambda i: (0, 0)),               # resident bias
            ],
            out_specs=pl.BlockSpec((tb, npad), lambda i: (i, 0)),
        ),
        compiler_params=pltpu.CompilerParams(
            dimension_semantics=("parallel",),
            vmem_limit_bytes=vmem_bytes),
    )(x_flat, w_packed, b_packed)

    return out[:, :NUM_OUT]


def reference_forward(x_nchw, W_full):
    """Pure-JAX reference reproducing sklearn PolynomialFeatures(2) + Linear(bias=False)."""
    B = x_nchw.shape[0]
    x = x_nchw.reshape(B, -1).astype(jnp.float32)
    F = x.shape[1]
    iu, ju = np.triu_indices(F)
    ones = jnp.ones((B, 1), jnp.float32)
    quad = (x[:, :, None] * x[:, None, :])[:, iu, ju]      # sklearn column order
    feats = jnp.concatenate([ones, x, quad], axis=1)       # (B, P)
    return feats @ W_full.T


if __name__ == "__main__":
    # Small shapes: B=2, C=4, H=2, W=2 -> F = 16, P = 1 + 16 + 136 = 153 (numfeat)
    B, C, H, W = 2, 4, 2, 2
    F = C * H * W
    P = 1 + F + F * (F + 1) // 2

    key = jax.random.PRNGKey(0)
    kx, kw = jax.random.split(key)
    x = jax.random.normal(kx, (B, C, H, W), dtype=jnp.float32)
    bound = 1.0 / np.sqrt(P)
    W_full = jax.random.uniform(kw, (10, P), dtype=jnp.float32,
                                minval=-bound, maxval=bound)

    # one-time, offline weight packing (device-resident thereafter)
    w_packed, b_packed = prepare_weights(W_full, F)

    fwd = jax.jit(polynomial_regression_forward)
    out = jax.block_until_ready(fwd(x, w_packed, b_packed))

    ref = jax.block_until_ready(reference_forward(x, W_full))
    assert out.shape == (B, 10)
    np.testing.assert_allclose(np.asarray(out), np.asarray(ref),
                               rtol=1e-4, atol=1e-4)
    print("KERNEL_OK")
</pallas_src>

<mosaic_0001>
module attributes {stable_mosaic.version = 11 : i64} {
  func.func @poly_regression_kernel(%arg0: i32, %arg1: memref<2x16xf32, #tpu.memory_space<vmem>>, %arg2: memref<16x2176xf32, #tpu.memory_space<vmem>>, %arg3: memref<1x128xf32, #tpu.memory_space<vmem>>, %arg4: memref<2x128xf32, #tpu.memory_space<vmem>>) attributes {dimension_semantics = [#tpu.dimension_semantics<parallel>], iteration_bounds = array<i64: 1>, scalar_prefetch = 0 : i64, scratch_operands = 0 : i64, tpu.core_type = #tpu.core_type<tc>, window_params = [{transform_indices = @transform_0, window_bounds = array<i64: 2, 16>}, {pipeline_mode = #tpu.pipeline_mode<synchronous>, transform_indices = @transform_1, window_bounds = array<i64: 16, 2176>}, {pipeline_mode = #tpu.pipeline_mode<synchronous>, transform_indices = @transform_2, window_bounds = array<i64: 1, 128>}, {transform_indices = @transform_3, window_bounds = array<i64: 2, 128>}]} {
    %c0 = arith.constant 0 : index
    %c0_0 = arith.constant 0 : index
    %0 = vector.load %arg1[%c0, %c0_0] : memref<2x16xf32, #tpu.memory_space<vmem>>, vector<2x16xf32>
    %c0_1 = arith.constant 0 : index
    %c0_2 = arith.constant 0 : index
    %1 = vector.load %arg2[%c0_1, %c0_2] : memref<16x2176xf32, #tpu.memory_space<vmem>>, vector<16x2176xf32>
    %cst = arith.constant dense<0.000000e+00> : vector<2x2176xf32>
    %2 = tpu.matmul %0, %1, %cst {dimension_numbers = #tpu.dot_dimension_numbers<[1], [0], [0], [1], [0, 0, 1, 1], [], []>} : vector<2x16xf32>, vector<16x2176xf32>, vector<2x2176xf32> -> vector<2x2176xf32>
    %c0_3 = arith.constant 0 : index
    %c0_4 = arith.constant 0 : index
    %3 = vector.load %arg3[%c0_3, %c0_4] : memref<1x128xf32, #tpu.memory_space<vmem>>, vector<1x128xf32>
    %4 = vector.extract_strided_slice %2 {offsets = [0, 2048], sizes = [2, 128], strides = [1, 1]} : vector<2x2176xf32> to vector<2x128xf32>
    %5 = vector.broadcast %3 : vector<1x128xf32> to vector<2x128xf32>
    %6 = arith.addf %5, %4 : vector<2x128xf32>
    %7 = vector.extract_strided_slice %0 {offsets = [0, 0], sizes = [2, 1], strides = [1, 1]} : vector<2x16xf32> to vector<2x1xf32>
    %8 = vector.extract_strided_slice %2 {offsets = [0, 0], sizes = [2, 128], strides = [1, 1]} : vector<2x2176xf32> to vector<2x128xf32>
    %9 = vector.broadcast %7 : vector<2x1xf32> to vector<2x128xf32>
    %10 = arith.mulf %9, %8 : vector<2x128xf32>
    %11 = arith.addf %6, %10 : vector<2x128xf32>
    %12 = vector.extract_strided_slice %0 {offsets = [0, 1], sizes = [2, 1], strides = [1, 1]} : vector<2x16xf32> to vector<2x1xf32>
    %13 = vector.extract_strided_slice %2 {offsets = [0, 128], sizes = [2, 128], strides = [1, 1]} : vector<2x2176xf32> to vector<2x128xf32>
    %14 = vector.broadcast %12 : vector<2x1xf32> to vector<2x128xf32>
    %15 = arith.mulf %14, %13 : vector<2x128xf32>
    %16 = arith.addf %11, %15 : vector<2x128xf32>
    %17 = vector.extract_strided_slice %0 {offsets = [0, 2], sizes = [2, 1], strides = [1, 1]} : vector<2x16xf32> to vector<2x1xf32>
    %18 = vector.extract_strided_slice %2 {offsets = [0, 256], sizes = [2, 128], strides = [1, 1]} : vector<2x2176xf32> to vector<2x128xf32>
    %19 = vector.broadcast %17 : vector<2x1xf32> to vector<2x128xf32>
    %20 = arith.mulf %19, %18 : vector<2x128xf32>
    %21 = arith.addf %16, %20 : vector<2x128xf32>
    %22 = vector.extract_strided_slice %0 {offsets = [0, 3], sizes = [2, 1], strides = [1, 1]} : vector<2x16xf32> to vector<2x1xf32>
    %23 = vector.extract_strided_slice %2 {offsets = [0, 384], sizes = [2, 128], strides = [1, 1]} : vector<2x2176xf32> to vector<2x128xf32>
    %24 = vector.broadcast %22 : vector<2x1xf32> to vector<2x128xf32>
    %25 = arith.mulf %24, %23 : vector<2x128xf32>
    %26 = arith.addf %21, %25 : vector<2x128xf32>
    %27 = vector.extract_strided_slice %0 {offsets = [0, 4], sizes = [2, 1], strides = [1, 1]} : vector<2x16xf32> to vector<2x1xf32>
    %28 = vector.extract_strided_slice %2 {offsets = [0, 512], sizes = [2, 128], strides = [1, 1]} : vector<2x2176xf32> to vector<2x128xf32>
    %29 = vector.broadcast %27 : vector<2x1xf32> to vector<2x128xf32>
    %30 = arith.mulf %29, %28 : vector<2x128xf32>
    %31 = arith.addf %26, %30 : vector<2x128xf32>
    %32 = vector.extract_strided_slice %0 {offsets = [0, 5], sizes = [2, 1], strides = [1, 1]} : vector<2x16xf32> to vector<2x1xf32>
    %33 = vector.extract_strided_slice %2 {offsets = [0, 640], sizes = [2, 128], strides = [1, 1]} : vector<2x2176xf32> to vector<2x128xf32>
    %34 = vector.broadcast %32 : vector<2x1xf32> to vector<2x128xf32>
    %35 = arith.mulf %34, %33 : vector<2x128xf32>
    %36 = arith.addf %31, %35 : vector<2x128xf32>
    %37 = vector.extract_strided_slice %0 {offsets = [0, 6], sizes = [2, 1], strides = [1, 1]} : vector<2x16xf32> to vector<2x1xf32>
    %38 = vector.extract_strided_slice %2 {offsets = [0, 768], sizes = [2, 128], strides = [1, 1]} : vector<2x2176xf32> to vector<2x128xf32>
    %39 = vector.broadcast %37 : vector<2x1xf32> to vector<2x128xf32>
    %40 = arith.mulf %39, %38 : vector<2x128xf32>
    %41 = arith.addf %36, %40 : vector<2x128xf32>
    %42 = vector.extract_strided_slice %0 {offsets = [0, 7], sizes = [2, 1], strides = [1, 1]} : vector<2x16xf32> to vector<2x1xf32>
    %43 = vector.extract_strided_slice %2 {offsets = [0, 896], sizes = [2, 128], strides = [1, 1]} : vector<2x2176xf32> to vector<2x128xf32>
    %44 = vector.broadcast %42 : vector<2x1xf32> to vector<2x128xf32>
    %45 = arith.mulf %44, %43 : vector<2x128xf32>
    %46 = arith.addf %41, %45 : vector<2x128xf32>
    %47 = vector.extract_strided_slice %0 {offsets = [0, 8], sizes = [2, 1], strides = [1, 1]} : vector<2x16xf32> to vector<2x1xf32>
    %48 = vector.extract_strided_slice %2 {offsets = [0, 1024], sizes = [2, 128], strides = [1, 1]} : vector<2x2176xf32> to vector<2x128xf32>
    %49 = vector.broadcast %47 : vector<2x1xf32> to vector<2x128xf32>
    %50 = arith.mulf %49, %48 : vector<2x128xf32>
    %51 = arith.addf %46, %50 : vector<2x128xf32>
    %52 = vector.extract_strided_slice %0 {offsets = [0, 9], sizes = [2, 1], strides = [1, 1]} : vector<2x16xf32> to vector<2x1xf32>
    %53 = vector.extract_strided_slice %2 {offsets = [0, 1152], sizes = [2, 128], strides = [1, 1]} : vector<2x2176xf32> to vector<2x128xf32>
    %54 = vector.broadcast %52 : vector<2x1xf32> to vector<2x128xf32>
    %55 = arith.mulf %54, %53 : vector<2x128xf32>
    %56 = arith.addf %51, %55 : vector<2x128xf32>
    %57 = vector.extract_strided_slice %0 {offsets = [0, 10], sizes = [2, 1], strides = [1, 1]} : vector<2x16xf32> to vector<2x1xf32>
    %58 = vector.extract_strided_slice %2 {offsets = [0, 1280], sizes = [2, 128], strides = [1, 1]} : vector<2x2176xf32> to vector<2x128xf32>
    %59 = vector.broadcast %57 : vector<2x1xf32> to vector<2x128xf32>
    %60 = arith.mulf %59, %58 : vector<2x128xf32>
    %61 = arith.addf %56, %60 : vector<2x128xf32>
    %62 = vector.extract_strided_slice %0 {offsets = [0, 11], sizes = [2, 1], strides = [1, 1]} : vector<2x16xf32> to vector<2x1xf32>
    %63 = vector.extract_strided_slice %2 {offsets = [0, 1408], sizes = [2, 128], strides = [1, 1]} : vector<2x2176xf32> to vector<2x128xf32>
    %64 = vector.broadcast %62 : vector<2x1xf32> to vector<2x128xf32>
    %65 = arith.mulf %64, %63 : vector<2x128xf32>
    %66 = arith.addf %61, %65 : vector<2x128xf32>
    %67 = vector.extract_strided_slice %0 {offsets = [0, 12], sizes = [2, 1], strides = [1, 1]} : vector<2x16xf32> to vector<2x1xf32>
    %68 = vector.extract_strided_slice %2 {offsets = [0, 1536], sizes = [2, 128], strides = [1, 1]} : vector<2x2176xf32> to vector<2x128xf32>
    %69 = vector.broadcast %67 : vector<2x1xf32> to vector<2x128xf32>
    %70 = arith.mulf %69, %68 : vector<2x128xf32>
    %71 = arith.addf %66, %70 : vector<2x128xf32>
    %72 = vector.extract_strided_slice %0 {offsets = [0, 13], sizes = [2, 1], strides = [1, 1]} : vector<2x16xf32> to vector<2x1xf32>
    %73 = vector.extract_strided_slice %2 {offsets = [0, 1664], sizes = [2, 128], strides = [1, 1]} : vector<2x2176xf32> to vector<2x128xf32>
    %74 = vector.broadcast %72 : vector<2x1xf32> to vector<2x128xf32>
    %75 = arith.mulf %74, %73 : vector<2x128xf32>
    %76 = arith.addf %71, %75 : vector<2x128xf32>
    %77 = vector.extract_strided_slice %0 {offsets = [0, 14], sizes = [2, 1], strides = [1, 1]} : vector<2x16xf32> to vector<2x1xf32>
    %78 = vector.extract_strided_slice %2 {offsets = [0, 1792], sizes = [2, 128], strides = [1, 1]} : vector<2x2176xf32> to vector<2x128xf32>
    %79 = vector.broadcast %77 : vector<2x1xf32> to vector<2x128xf32>
    %80 = arith.mulf %79, %78 : vector<2x128xf32>
    %81 = arith.addf %76, %80 : vector<2x128xf32>
    %82 = vector.extract_strided_slice %0 {offsets = [0, 15], sizes = [2, 1], strides = [1, 1]} : vector<2x16xf32> to vector<2x1xf32>
    %83 = vector.extract_strided_slice %2 {offsets = [0, 1920], sizes = [2, 128], strides = [1, 1]} : vector<2x2176xf32> to vector<2x128xf32>
    %84 = vector.broadcast %82 : vector<2x1xf32> to vector<2x128xf32>
    %85 = arith.mulf %84, %83 : vector<2x128xf32>
    %86 = arith.addf %81, %85 : vector<2x128xf32>
    %c0_5 = arith.constant 0 : index
    %c0_6 = arith.constant 0 : index
    %87 = vector.load %arg4[%c0_5, %c0_6] : memref<2x128xf32, #tpu.memory_space<vmem>>, vector<2x128xf32>
    tpu.vector_store %arg4[%c0_5, %c0_6], %86 {strides = array<i32>} : memref<2x128xf32, #tpu.memory_space<vmem>>, vector<2x128xf32>,
    return
  }
  func.func @transform_0(%arg0: i32) -> (i32, i32) {
    %c0_i32 = arith.constant 0 : i32
    %c0_i32_0 = arith.constant 0 : i32
    return %arg0, %c0_i32 : i32, i32
  }
  func.func @transform_1(%arg0: i32) -> (i32, i32) {
    %c0_i32 = arith.constant 0 : i32
    %c0_i32_0 = arith.constant 0 : i32
    %c0_i32_1 = arith.constant 0 : i32
    return %c0_i32, %c0_i32_0 : i32, i32
  }
  func.func @transform_2(%arg0: i32) -> (i32, i32) {
    %c0_i32 = arith.constant 0 : i32
    %c0_i32_0 = arith.constant 0 : i32
    %c0_i32_1 = arith.constant 0 : i32
    return %c0_i32, %c0_i32_0 : i32, i32
  }
  func.func @transform_3(%arg0: i32) -> (i32, i32) {
    %c0_i32 = arith.constant 0 : i32
    %c0_i32_0 = arith.constant 0 : i32
    return %arg0, %c0_i32 : i32, i32
  }
}

</mosaic_0001>

<llo_original>
// kernel: polynomial_regression_forward.1
$region0: #{polynomial_regression_forward.1}
  #allocation0 [shape = 'u32[]', space=smem, size = 0x4, offset = 0x4, fixed_abs, tag = 'smem constant byte address 0x4 - core index']
  #allocation1 [shape = 'u32[72,128]{1,0:T(1,128)}', space=vmem, size = 0x9000, scoped, tag = 'internal scratch']
  %s0 = inlined_call_operand.vmem [shape: f32[2,16], index: 0, kind: input, shape index: {}]
  %s1 = inlined_call_operand.hbm [shape: f32[16,2176], index: 1, kind: input, shape index: {}]
  %s2 = inlined_call_operand.vmem [shape: f32[1,128], index: 2, kind: input, shape index: {}]
  %s3 = inlined_call_operand.hbm [shape: f32[2,128], index: 3, kind: output, shape index: {}]
  %s4 = sld [smem:[#allocation0]]
  $region26: #{polynomial_regression_forward.1} parent=0
    _
  %s6 = ssub.s32 1, %s4
  %s7 = scalar_select 0, %s6, %s4
  $region1: #{polynomial_regression_forward.1} parent=0
    #allocation2 [shape = 'u8[139264]{0}', space=vmem, size = 0x22000, scoped, tag = 'input window, operand 1, single buffered']
    #allocation3 [shape = 's32[1]{0}', space=sflag, size = 0x4, scoped, tag = 'scoped memory for polynomial_regression_forward.1']
    #allocation4 [shape = 's32[1]{0}', space=sflag, size = 0x4, scoped, tag = 'scoped memory for polynomial_regression_forward.1']
    #allocation5 [shape = 'u8[1024]{0}', space=vmem, size = 0x400, scoped, tag = 'output window, operand 0, single buffered']
    %8 = vsyncpa [#allocation3], 0
    %9 = vsyncpa [#allocation4], 0
    // Predicated region
    $region2: #{polynomial_regression_forward.1} parent=1 // pred_check
      _
    $region3: #{polynomial_regression_forward.1} parent=1 // pred_check_branch
      %11 = sbr.rel (0) target = $region5
    $region4: #{polynomial_regression_forward.1} parent=1 // pred_region
      _
    $region5: #{polynomial_regression_forward.1} parent=1 // pred_fallthru
      _
    // Predicated region
    $region6: #{polynomial_regression_forward.1} parent=1 // pred_check
      _
    $region7: #{polynomial_regression_forward.1} parent=1 // pred_check_branch
      %13 = sbr.rel (0) target = $region9
    $region8: #{polynomial_regression_forward.1} parent=1 // pred_region
      %15 = vsyncadd [#allocation3], 0
      %s16 = sshll.u32 %s1, 4
      %s17 = int_to_ptr.hbm [resolvable:$true] %s16
      %s18 = sshll.u32 [#allocation2], 4
      %s19 = int_to_ptr.vmem [resolvable:$true] %s18
      %24 = dma.hbm_to_vmem [thread:$0]  %s17, 4352, %s19, [#allocation3], 2176, 2176, 136
    $region9: #{polynomial_regression_forward.1} parent=1 // pred_fallthru
      _
    // Predicated region
    $region10: #{polynomial_regression_forward.1} parent=1 // pred_check
      _
    $region11: #{polynomial_regression_forward.1} parent=1 // pred_check_branch
      %26 = sbr.rel (0) target = $region13
    $region12: #{polynomial_regression_forward.1} parent=1 // pred_region
      _
    $region13: #{polynomial_regression_forward.1} parent=1 // pred_fallthru
      _
    // Predicated region
    $region14: #{polynomial_regression_forward.1} parent=1 // pred_check
      _
    $region15: #{polynomial_regression_forward.1} parent=1 // pred_check_branch
      %28 = sbr.rel (0) target = $region17
    $region16: #{polynomial_regression_forward.1} parent=1 // pred_region
      %30 = dma.done [#allocation3], 4352
    $region17: #{polynomial_regression_forward.1} parent=1 // pred_fallthru
      _
    %v31 = vld [vmem:[%s0] sm:$0x3]
    %v32 = vld [vmem:[#allocation2] sm:$0xff]
    %v33 = vld [vmem:[#allocation2 + $0x8] sm:$0xff]
    %v34 = vld [vmem:[#allocation2 + $0x10] sm:$0xff]
    %v35 = vld [vmem:[#allocation2 + $0x18] sm:$0xff]
    %v36 = vld [vmem:[#allocation2 + $0x20] sm:$0xff]
    %v37 = vld [vmem:[#allocation2 + $0x28] sm:$0xff]
    %v38 = vld [vmem:[#allocation2 + $0x30] sm:$0xff]
    %v39 = vld [vmem:[#allocation2 + $0x38] sm:$0xff]
    %v40 = vld [vmem:[#allocation2 + $0x40] sm:$0xff]
    %v41 = vld [vmem:[#allocation2 + $0x48] sm:$0xff]
    %v42 = vld [vmem:[#allocation2 + $0x50] sm:$0xff]
    %v43 = vld [vmem:[#allocation2 + $0x58] sm:$0xff]
    %v44 = vld [vmem:[#allocation2 + $0x60] sm:$0xff]
    %v45 = vld [vmem:[#allocation2 + $0x68] sm:$0xff]
    %v46 = vld [vmem:[#allocation2 + $0x70] sm:$0xff]
    %v47 = vld [vmem:[#allocation2 + $0x78] sm:$0xff]
    %v48 = vld [vmem:[#allocation2 + $0x80] sm:$0xff]
    %v49 = vld [vmem:[#allocation2 + $0x88] sm:$0xff]
    %v50 = vld [vmem:[#allocation2 + $0x90] sm:$0xff]
    %v51 = vld [vmem:[#allocation2 + $0x98] sm:$0xff]
    %v52 = vld [vmem:[#allocation2 + $0xa0] sm:$0xff]
    %v53 = vld [vmem:[#allocation2 + $0xa8] sm:$0xff]
    %v54 = vld [vmem:[#allocation2 + $0xb0] sm:$0xff]
    %v55 = vld [vmem:[#allocation2 + $0xb8] sm:$0xff]
    %v56 = vld [vmem:[#allocation2 + $0xc0] sm:$0xff]
    %v57 = vld [vmem:[#allocation2 + $0xc8] sm:$0xff]
    %v58 = vld [vmem:[#allocation2 + $0xd0] sm:$0xff]
    %v59 = vld [vmem:[#allocation2 + $0xd8] sm:$0xff]
    %v60 = vld [vmem:[#allocation2 + $0xe0] sm:$0xff]
    %v61 = vld [vmem:[#allocation2 + $0xe8] sm:$0xff]
    %v62 = vld [vmem:[#allocation2 + $0xf0] sm:$0xff]
    %v63 = vld [vmem:[#allocation2 + $0xf8] sm:$0xff]
    %v64 = vld [vmem:[#allocation2 + $0x100] sm:$0xff]
    %v65 = vld [vmem:[#allocation2 + $0x108] sm:$0xff]
    %vm66 = vcmask 130048
    %v68 = vsel %vm66, %v31, 0
    %70 = vmatpush.msra.mxu0 0.0
    %71 = vmatpush.msra.mxu0 0.0
    %72 = vmatpush.msra.mxu0 0.0
    %73 = vmatpush.msra.mxu0 0.0
    %74 = vmatpush.msra.mxu0 0.0
    %75 = vmatpush.msra.mxu0 0.0
    %76 = vmatpush.msra.mxu0 0.0
    %77 = vmatpush.msra.mxu0 0.0
    %78 = vmatpush.msra.mxu0 0.0
    %79 = vmatpush.msra.mxu0 0.0
    %80 = vmatpush.msra.mxu0 0.0
    %81 = vmatpush.msra.mxu0 0.0
    %82 = vmatpush.msra.mxu0 0.0
    %83 = vmatpush.msra.mxu0 0.0
    %84 = vmatpush.msra.mxu0 %v49
    %85 = vmatpush.msra.mxu0 %v32
    %86 = vmatmul.f32.gmra.mxu0 %v68
    %v87 = vpop.f32.mrf.mxu0
    %v88 = vadd.f32 0.0, %v87
    %89 = vdwg.mxu0
    %90 = vmatpush.msra.mxu0 0.0
    %91 = vmatpush.msra.mxu0 0.0
    %92 = vmatpush.msra.mxu0 0.0
    %93 = vmatpush.msra.mxu0 0.0
    %94 = vmatpush.msra.mxu0 0.0
    %95 = vmatpush.msra.mxu0 0.0
    %96 = vmatpush.msra.mxu0 0.0
    %97 = vmatpush.msra.mxu0 0.0
    %98 = vmatpush.msra.mxu0 0.0
    %99 = vmatpush.msra.mxu0 0.0
    %100 = vmatpush.msra.mxu0 0.0
    %101 = vmatpush.msra.mxu0 0.0
    %102 = vmatpush.msra.mxu0 0.0
    %103 = vmatpush.msra.mxu0 0.0
    %104 = vmatpush.msra.mxu0 %v50
    %105 = vmatpush.msra.mxu0 %v33
    %106 = vmatmul.f32.gmra.mxu0 %v68
    %v107 = vpop.f32.mrf.mxu0
    %v108 = vadd.f32 0.0, %v107
    %109 = vdwg.mxu0
    %110 = vmatpush.msra.mxu0 0.0
    %111 = vmatpush.msra.mxu0 0.0
    %112 = vmatpush.msra.mxu0 0.0
    %113 = vmatpush.msra.mxu0 0.0
    %114 = vmatpush.msra.mxu0 0.0
    %115 = vmatpush.msra.mxu0 0.0
    %116 = vmatpush.msra.mxu0 0.0
    %117 = vmatpush.msra.mxu0 0.0
    %118 = vmatpush.msra.mxu0 0.0
    %119 = vmatpush.msra.mxu0 0.0
    %120 = vmatpush.msra.mxu0 0.0
    %121 = vmatpush.msra.mxu0 0.0
    %122 = vmatpush.msra.mxu0 0.0
    %123 = vmatpush.msra.mxu0 0.0
    %124 = vmatpush.msra.mxu0 %v51
    %125 = vmatpush.msra.mxu0 %v34
    %126 = vmatmul.f32.gmra.mxu0 %v68
    %v127 = vpop.f32.mrf.mxu0
    %v128 = vadd.f32 0.0, %v127
    %129 = vdwg.mxu0
    %130 = vmatpush.msra.mxu0 0.0
    %131 = vmatpush.msra.mxu0 0.0
    %132 = vmatpush.msra.mxu0 0.0
    %133 = vmatpush.msra.mxu0 0.0
    %134 = vmatpush.msra.mxu0 0.0
    %135 = vmatpush.msra.mxu0 0.0
    %136 = vmatpush.msra.mxu0 0.0
    %137 = vmatpush.msra.mxu0 0.0
    %138 = vmatpush.msra.mxu0 0.0
    %139 = vmatpush.msra.mxu0 0.0
    %140 = vmatpush.msra.mxu0 0.0
    %141 = vmatpush.msra.mxu0 0.0
    %142 = vmatpush.msra.mxu0 0.0
    %143 = vmatpush.msra.mxu0 0.0
    %144 = vmatpush.msra.mxu0 %v52
    %145 = vmatpush.msra.mxu0 %v35
    %146 = vmatmul.f32.gmra.mxu0 %v68
    %v147 = vpop.f32.mrf.mxu0
    %v148 = vadd.f32 0.0, %v147
    %149 = vdwg.mxu0
    %150 = vmatpush.msra.mxu0 0.0
    %151 = vmatpush.msra.mxu0 0.0
    %152 = vmatpush.msra.mxu0 0.0
    %153 = vmatpush.msra.mxu0 0.0
    %154 = vmatpush.msra.mxu0 0.0
    %155 = vmatpush.msra.mxu0 0.0
    %156 = vmatpush.msra.mxu0 0.0
    %157 = vmatpush.msra.mxu0 0.0
    %158 = vmatpush.msra.mxu0 0.0
    %159 = vmatpush.msra.mxu0 0.0
    %160 = vmatpush.msra.mxu0 0.0
    %161 = vmatpush.msra.mxu0 0.0
    %162 = vmatpush.msra.mxu0 0.0
    %163 = vmatpush.msra.mxu0 0.0
    %164 = vmatpush.msra.mxu0 %v53
    %165 = vmatpush.msra.mxu0 %v36
    %166 = vmatmul.f32.gmra.mxu0 %v68
    %v167 = vpop.f32.mrf.mxu0
    %v168 = vadd.f32 0.0, %v167
    %169 = vdwg.mxu0
    %170 = vmatpush.msra.mxu0 0.0
    %171 = vmatpush.msra.mxu0 0.0
    %172 = vmatpush.msra.mxu0 0.0
    %173 = vmatpush.msra.mxu0 0.0
    %174 = vmatpush.msra.mxu0 0.0
    %175 = vmatpush.msra.mxu0 0.0
    %176 = vmatpush.msra.mxu0 0.0
    %177 = vmatpush.msra.mxu0 0.0
    %178 = vmatpush.msra.mxu0 0.0
    %179 = vmatpush.msra.mxu0 0.0
    %180 = vmatpush.msra.mxu0 0.0
    %181 = vmatpush.msra.mxu0 0.0
    %182 = vmatpush.msra.mxu0 0.0
    %183 = vmatpush.msra.mxu0 0.0
    %184 = vmatpush.msra.mxu0 %v54
    %185 = vmatpush.msra.mxu0 %v37
    %186 = vmatmul.f32.gmra.mxu0 %v68
    %v187 = vpop.f32.mrf.mxu0
    %v188 = vadd.f32 0.0, %v187
    %189 = vdwg.mxu0
    %190 = vmatpush.msra.mxu0 0.0
    %191 = vmatpush.msra.mxu0 0.0
    %192 = vmatpush.msra.mxu0 0.0
    %193 = vmatpush.msra.mxu0 0.0
    %194 = vmatpush.msra.mxu0 0.0
    %195 = vmatpush.msra.mxu0 0.0
    %196 = vmatpush.msra.mxu0 0.0
    %197 = vmatpush.msra.mxu0 0.0
    %198 = vmatpush.msra.mxu0 0.0
    %199 = vmatpush.msra.mxu0 0.0
    %200 = vmatpush.msra.mxu0 0.0
    %201 = vmatpush.msra.mxu0 0.0
    %202 = vmatpush.msra.mxu0 0.0
    %203 = vmatpush.msra.mxu0 0.0
    %204 = vmatpush.msra.mxu0 %v55
    %205 = vmatpush.msra.mxu0 %v38
    %206 = vmatmul.f32.gmra.mxu0 %v68
    %v207 = vpop.f32.mrf.mxu0
    %v208 = vadd.f32 0.0, %v207
    %209 = vdwg.mxu0
    %210 = vmatpush.msra.mxu0 0.0
    %211 = vmatpush.msra.mxu0 0.0
    %212 = vmatpush.msra.mxu0 0.0
    %213 = vmatpush.msra.mxu0 0.0
    %214 = vmatpush.msra.mxu0 0.0
    %215 = vmatpush.msra.mxu0 0.0
    %216 = vmatpush.msra.mxu0 0.0
    %217 = vmatpush.msra.mxu0 0.0
    %218 = vmatpush.msra.mxu0 0.0
    %219 = vmatpush.msra.mxu0 0.0
    %220 = vmatpush.msra.mxu0 0.0
    %221 = vmatpush.msra.mxu0 0.0
    %222 = vmatpush.msra.mxu0 0.0
    %223 = vmatpush.msra.mxu0 0.0
    %224 = vmatpush.msra.mxu0 %v56
    %225 = vmatpush.msra.mxu0 %v39
    %226 = vmatmul.f32.gmra.mxu0 %v68
    %v227 = vpop.f32.mrf.mxu0
    %v228 = vadd.f32 0.0, %v227
    %229 = vdwg.mxu0
    %230 = vmatpush.msra.mxu0 0.0
    %231 = vmatpush.msra.mxu0 0.0
    %232 = vmatpush.msra.mxu0 0.0
    %233 = vmatpush.msra.mxu0 0.0
    %234 = vmatpush.msra.mxu0 0.0
    %235 = vmatpush.msra.mxu0 0.0
    %236 = vmatpush.msra.mxu0 0.0
    %237 = vmatpush.msra.mxu0 0.0
    %238 = vmatpush.msra.mxu0 0.0
    %239 = vmatpush.msra.mxu0 0.0
    %240 = vmatpush.msra.mxu0 0.0
    %241 = vmatpush.msra.mxu0 0.0
    %242 = vmatpush.msra.mxu0 0.0
    %243 = vmatpush.msra.mxu0 0.0
    %244 = vmatpush.msra.mxu0 %v57
    %245 = vmatpush.msra.mxu0 %v40
    %246 = vmatmul.f32.gmra.mxu0 %v68
    %v247 = vpop.f32.mrf.mxu0
    %v248 = vadd.f32 0.0, %v247
    %249 = vdwg.mxu0
    %250 = vmatpush.msra.mxu0 0.0
    %251 = vmatpush.msra.mxu0 0.0
    %252 = vmatpush.msra.mxu0 0.0
    %253 = vmatpush.msra.mxu0 0.0
    %254 = vmatpush.msra.mxu0 0.0
    %255 = vmatpush.msra.mxu0 0.0
    %256 = vmatpush.msra.mxu0 0.0
    %257 = vmatpush.msra.mxu0 0.0
    %258 = vmatpush.msra.mxu0 0.0
    %259 = vmatpush.msra.mxu0 0.0
    %260 = vmatpush.msra.mxu0 0.0
    %261 = vmatpush.msra.mxu0 0.0
    %262 = vmatpush.msra.mxu0 0.0
    %263 = vmatpush.msra.mxu0 0.0
    %264 = vmatpush.msra.mxu0 %v58
    %265 = vmatpush.msra.mxu0 %v41
    %266 = vmatmul.f32.gmra.mxu0 %v68
    %v267 = vpop.f32.mrf.mxu0
    %v268 = vadd.f32 0.0, %v267
    %269 = vdwg.mxu0
    %270 = vmatpush.msra.mxu0 0.0
    %271 = vmatpush.msra.mxu0 0.0
    %272 = vmatpush.msra.mxu0 0.0
    %273 = vmatpush.msra.mxu0 0.0
    %274 = vmatpush.msra.mxu0 0.0
    %275 = vmatpush.msra.mxu0 0.0
    %276 = vmatpush.msra.mxu0 0.0
    %277 = vmatpush.msra.mxu0 0.0
    %278 = vmatpush.msra.mxu0 0.0
    %279 = vmatpush.msra.mxu0 0.0
    %280 = vmatpush.msra.mxu0 0.0
    %281 = vmatpush.msra.mxu0 0.0
    %282 = vmatpush.msra.mxu0 0.0
    %283 = vmatpush.msra.mxu0 0.0
    %284 = vmatpush.msra.mxu0 %v59
    %285 = vmatpush.msra.mxu0 %v42
    %286 = vmatmul.f32.gmra.mxu0 %v68
    %v287 = vpop.f32.mrf.mxu0
    %v288 = vadd.f32 0.0, %v287
    %289 = vdwg.mxu0
    %290 = vmatpush.msra.mxu0 0.0
    %291 = vmatpush.msra.mxu0 0.0
    %292 = vmatpush.msra.mxu0 0.0
    %293 = vmatpush.msra.mxu0 0.0
    %294 = vmatpush.msra.mxu0 0.0
    %295 = vmatpush.msra.mxu0 0.0
    %296 = vmatpush.msra.mxu0 0.0
    %297 = vmatpush.msra.mxu0 0.0
    %298 = vmatpush.msra.mxu0 0.0
    %299 = vmatpush.msra.mxu0 0.0
    %300 = vmatpush.msra.mxu0 0.0
    %301 = vmatpush.msra.mxu0 0.0
    %302 = vmatpush.msra.mxu0 0.0
    %303 = vmatpush.msra.mxu0 0.0
    %304 = vmatpush.msra.mxu0 %v60
    %305 = vmatpush.msra.mxu0 %v43
    %306 = vmatmul.f32.gmra.mxu0 %v68
    %v307 = vpop.f32.mrf.mxu0
    %v308 = vadd.f32 0.0, %v307
    %309 = vdwg.mxu0
    %310 = vmatpush.msra.mxu0 0.0
    %311 = vmatpush.msra.mxu0 0.0
    %312 = vmatpush.msra.mxu0 0.0
    %313 = vmatpush.msra.mxu0 0.0
    %314 = vmatpush.msra.mxu0 0.0
    %315 = vmatpush.msra.mxu0 0.0
    %316 = vmatpush.msra.mxu0 0.0
    %317 = vmatpush.msra.mxu0 0.0
    %318 = vmatpush.msra.mxu0 0.0
    %319 = vmatpush.msra.mxu0 0.0
    %320 = vmatpush.msra.mxu0 0.0
    %321 = vmatpush.msra.mxu0 0.0
    %322 = vmatpush.msra.mxu0 0.0
    %323 = vmatpush.msra.mxu0 0.0
    %324 = vmatpush.msra.mxu0 %v61
    %325 = vmatpush.msra.mxu0 %v44
    %326 = vmatmul.f32.gmra.mxu0 %v68
    %v327 = vpop.f32.mrf.mxu0
    %v328 = vadd.f32 0.0, %v327
    %329 = vdwg.mxu0
    %330 = vmatpush.msra.mxu0 0.0
    %331 = vmatpush.msra.mxu0 0.0
    %332 = vmatpush.msra.mxu0 0.0
    %333 = vmatpush.msra.mxu0 0.0
    %334 = vmatpush.msra.mxu0 0.0
    %335 = vmatpush.msra.mxu0 0.0
    %336 = vmatpush.msra.mxu0 0.0
    %337 = vmatpush.msra.mxu0 0.0
    %338 = vmatpush.msra.mxu0 0.0
    %339 = vmatpush.msra.mxu0 0.0
    %340 = vmatpush.msra.mxu0 0.0
    %341 = vmatpush.msra.mxu0 0.0
    %342 = vmatpush.msra.mxu0 0.0
    %343 = vmatpush.msra.mxu0 0.0
    %344 = vmatpush.msra.mxu0 %v62
    %345 = vmatpush.msra.mxu0 %v45
    %346 = vmatmul.f32.gmra.mxu0 %v68
    %v347 = vpop.f32.mrf.mxu0
    %v348 = vadd.f32 0.0, %v347
    %349 = vdwg.mxu0
    %350 = vmatpush.msra.mxu0 0.0
    %351 = vmatpush.msra.mxu0 0.0
    %352 = vmatpush.msra.mxu0 0.0
    %353 = vmatpush.msra.mxu0 0.0
    %354 = vmatpush.msra.mxu0 0.0
    %355 = vmatpush.msra.mxu0 0.0
    %356 = vmatpush.msra.mxu0 0.0
    %357 = vmatpush.msra.mxu0 0.0
    %358 = vmatpush.msra.mxu0 0.0
    %359 = vmatpush.msra.mxu0 0.0
    %360 = vmatpush.msra.mxu0 0.0
    %361 = vmatpush.msra.mxu0 0.0
    %362 = vmatpush.msra.mxu0 0.0
    %363 = vmatpush.msra.mxu0 0.0
    %364 = vmatpush.msra.mxu0 %v63
    %365 = vmatpush.msra.mxu0 %v46
    %366 = vmatmul.f32.gmra.mxu0 %v68
    %v367 = vpop.f32.mrf.mxu0
    %v368 = vadd.f32 0.0, %v367
    %369 = vdwg.mxu0
    %370 = vmatpush.msra.mxu0 0.0
    %371 = vmatpush.msra.mxu0 0.0
    %372 = vmatpush.msra.mxu0 0.0
    %373 = vmatpush.msra.mxu0 0.0
    %374 = vmatpush.msra.mxu0 0.0
    %375 = vmatpush.msra.mxu0 0.0
    %376 = vmatpush.msra.mxu0 0.0
    %377 = vmatpush.msra.mxu0 0.0
    %378 = vmatpush.msra.mxu0 0.0
    %379 = vmatpush.msra.mxu0 0.0
    %380 = vmatpush.msra.mxu0 0.0
    %381 = vmatpush.msra.mxu0 0.0
    %382 = vmatpush.msra.mxu0 0.0
    %383 = vmatpush.msra.mxu0 0.0
    %384 = vmatpush.msra.mxu0 %v64
    %385 = vmatpush.msra.mxu0 %v47
    %386 = vmatmul.f32.gmra.mxu0 %v68
    %v387 = vpop.f32.mrf.mxu0
    %v388 = vadd.f32 0.0, %v387
    %389 = vdwg.mxu0
    %390 = vmatpush.msra.mxu0 0.0
    %391 = vmatpush.msra.mxu0 0.0
    %392 = vmatpush.msra.mxu0 0.0
    %393 = vmatpush.msra.mxu0 0.0
    %394 = vmatpush.msra.mxu0 0.0
    %395 = vmatpush.msra.mxu0 0.0
    %396 = vmatpush.msra.mxu0 0.0
    %397 = vmatpush.msra.mxu0 0.0
    %398 = vmatpush.msra.mxu0 0.0
    %399 = vmatpush.msra.mxu0 0.0
    %400 = vmatpush.msra.mxu0 0.0
    %401 = vmatpush.msra.mxu0 0.0
    %402 = vmatpush.msra.mxu0 0.0
    %403 = vmatpush.msra.mxu0 0.0
    %404 = vmatpush.msra.mxu0 %v65
    %405 = vmatpush.msra.mxu0 %v48
    %406 = vmatmul.f32.gmra.mxu0 %v68
    %v407 = vpop.f32.mrf.mxu0
    %v408 = vadd.f32 0.0, %v407
    %409 = vdwg.mxu0
    %v410 = vld [vmem:[%s2] sm:$0x1]
    %v412 = vperm.slane %v410, 0
    %v414 = vadd.f32 %v412, %v408
    %415 = vset.pattern.permute.xlu0 0
    %416 = vperm.xlu0 %415, %v31
    %v417 = vpop.permute.xlu0 %416
    %v419 = vmul.f32 %v417, %v88
    %v420 = vadd.f32 %v414, %v419
    %421 = vset.pattern.permute.xlu0 1
    %422 = vperm.xlu0 %421, %v31
    %v423 = vpop.permute.xlu0 %422
    %v425 = vmul.f32 %v423, %v108
    %v426 = vadd.f32 %v420, %v425
    %427 = vset.pattern.permute.xlu0 2
    %428 = vperm.xlu0 %427, %v31
    %v429 = vpop.permute.xlu0 %428
    %v431 = vmul.f32 %v429, %v128
    %v432 = vadd.f32 %v426, %v431
    %433 = vset.pattern.permute.xlu0 3
    %434 = vperm.xlu0 %433, %v31
    %v435 = vpop.permute.xlu0 %434
    %v437 = vmul.f32 %v435, %v148
    %v438 = vadd.f32 %v432, %v437
    %439 = vset.pattern.permute.xlu0 4
    %440 = vperm.xlu0 %439, %v31
    %v441 = vpop.permute.xlu0 %440
    %v443 = vmul.f32 %v441, %v168
    %v444 = vadd.f32 %v438, %v443
    %445 = vset.pattern.permute.xlu0 5
    %446 = vperm.xlu0 %445, %v31
    %v447 = vpop.permute.xlu0 %446
    %v449 = vmul.f32 %v447, %v188
    %v450 = vadd.f32 %v444, %v449
    %451 = vset.pattern.permute.xlu0 6
    %452 = vperm.xlu0 %451, %v31
    %v453 = vpop.permute.xlu0 %452
    %v455 = vmul.f32 %v453, %v208
    %v456 = vadd.f32 %v450, %v455
    %457 = vset.pattern.permute.xlu0 7
    %458 = vperm.xlu0 %457, %v31
    %v459 = vpop.permute.xlu0 %458
    %v461 = vmul.f32 %v459, %v228
    %v462 = vadd.f32 %v456, %v461
    %463 = vset.pattern.permute.xlu0 8
    %464 = vperm.xlu0 %463, %v31
    %v465 = vpop.permute.xlu0 %464
    %v467 = vmul.f32 %v465, %v248
    %v468 = vadd.f32 %v462, %v467
    %469 = vset.pattern.permute.xlu0 9
    %470 = vperm.xlu0 %469, %v31
    %v471 = vpop.permute.xlu0 %470
    %v473 = vmul.f32 %v471, %v268
    %v474 = vadd.f32 %v468, %v473
    %475 = vset.pattern.permute.xlu0 10
    %476 = vperm.xlu0 %475, %v31
    %v477 = vpop.permute.xlu0 %476
    %v479 = vmul.f32 %v477, %v288
    %v480 = vadd.f32 %v474, %v479
    %481 = vset.pattern.permute.xlu0 11
    %482 = vperm.xlu0 %481, %v31
    %v483 = vpop.permute.xlu0 %482
    %v485 = vmul.f32 %v483, %v308
    %v486 = vadd.f32 %v480, %v485
    %487 = vset.pattern.permute.xlu0 12
    %488 = vperm.xlu0 %487, %v31
    %v489 = vpop.permute.xlu0 %488
    %v491 = vmul.f32 %v489, %v328
    %v492 = vadd.f32 %v486, %v491
    %493 = vset.pattern.permute.xlu0 13
    %494 = vperm.xlu0 %493, %v31
    %v495 = vpop.permute.xlu0 %494
    %v497 = vmul.f32 %v495, %v348
    %v498 = vadd.f32 %v492, %v497
    %499 = vset.pattern.permute.xlu0 14
    %500 = vperm.xlu0 %499, %v31
    %v501 = vpop.permute.xlu0 %500
    %v503 = vmul.f32 %v501, %v368
    %v504 = vadd.f32 %v498, %v503
    %505 = vset.pattern.permute.xlu0 15
    %506 = vperm.xlu0 %505, %v31
    %v507 = vpop.permute.xlu0 %506
    %v509 = vmul.f32 %v507, %v388
    %v510 = vadd.f32 %v504, %v509
    %511 = vst [vmem:[#allocation5] sm:$0x3] %v510
    // Predicated region
    $region18: #{polynomial_regression_forward.1} parent=1 // pred_check
      _
    $region19: #{polynomial_regression_forward.1} parent=1 // pred_check_branch
      %513 = sbr.rel (0) target = $region21
    $region20: #{polynomial_regression_forward.1} parent=1 // pred_region
      %515 = vsyncadd [#allocation4], 0
      %s517 = sshll.u32 [#allocation5], 4
      %s518 = int_to_ptr.vmem [resolvable:$true] %s517
      %s519 = sshll.u32 %s3, 4
      %s520 = int_to_ptr.hbm [resolvable:$true] %s519
      %522 = dma.vmem_to_hbm [thread:$0]  %s518, 32, %s520, [#allocation4]
    $region21: #{polynomial_regression_forward.1} parent=1 // pred_fallthru
      _
    // Predicated region
    $region22: #{polynomial_regression_forward.1} parent=1 // pred_check
      _
    $region23: #{polynomial_regression_forward.1} parent=1 // pred_check_branch
      %524 = sbr.rel (0) target = $region25
    $region24: #{polynomial_regression_forward.1} parent=1 // pred_region
      %526 = dma.done [#allocation4], 32
    $region25: #{polynomial_regression_forward.1} parent=1 // pred_fallthru
      _
    %527 = vsyncpa [#allocation3], 1
    %528 = vsyncpa [#allocation4], 1

</llo_original>
